<compile_context>
chip_gen: v7x
topology: tpu7x:2x2x1
jax: 0.10.0
libtpu: 0.0.40
codegen_flags: <defaults>
</compile_context>

<pallas_src>
import functools
import math

import jax
import jax.numpy as jnp
from jax.experimental import pallas as pl
from jax.experimental.pallas import tpu as pltpu


def _round_up(x, m):
    return ((x + m - 1) // m) * m


def _block_diag(wa, wb):
    ra, ca = wa.shape
    rb, cb = wb.shape
    out = jnp.zeros((ra + rb, ca + cb), wa.dtype)
    out = out.at[:ra, :ca].set(wa)
    out = out.at[ra:, ca:].set(wb)
    return out


# -----------------------------------------------------------------------------
# Fused DCCAE kernel: both encoders + both decoders in one body, a/b streams
# fused per layer with block-diagonal weights.
#   refs = x_packed, (W,b)*n_enc, (W,b)*n_dec, hat_out, z_out
# -----------------------------------------------------------------------------
def _dccae_kernel(x_ref, *refs, n_enc, n_dec):
    enc = [(refs[2 * i], refs[2 * i + 1]) for i in range(n_enc)]
    off = 2 * n_enc
    dec = [(refs[off + 2 * i], refs[off + 2 * i + 1]) for i in range(n_dec)]
    hat_ref = refs[off + 2 * n_dec]
    z_ref = refs[off + 2 * n_dec + 1]

    def mlp(x, layers):
        # Hidden layers: Linear + Sigmoid; final layer: Linear only.
        h = x.astype(jnp.bfloat16)               # bf16 operands into the MXU
        n = len(layers)
        out = None
        for li, (w_ref, b_ref) in enumerate(layers):
            y = jnp.dot(h, w_ref[...], preferred_element_type=jnp.float32)
            y = y + b_ref[...]                   # f32 bias add (VPU)
            if li < n - 1:
                y = jax.nn.sigmoid(y)            # f32 sigmoid (EUP); v5e-safe
                h = y.astype(jnp.bfloat16)
            out = y
        return out                               # f32

    # Encoders: packed [x_a | x_b] -> packed [z_a | z_b]  (block-diag weights
    # keep the two streams independent; sigmoid is elementwise so separation
    # is preserved exactly).
    z = mlp(x_ref[...], enc)
    z_ref[...] = z.astype(z_ref.dtype)

    # Decoders consume the in-register z (no HBM round-trip):
    # packed [z_a | z_b] -> packed [a_hat | b_hat].
    hat = mlp(z, dec)
    hat_ref[...] = hat.astype(hat_ref.dtype)


# -----------------------------------------------------------------------------
# Parameter construction (per-branch init, then block-diagonal fusion)
# -----------------------------------------------------------------------------
def _init_mlp_params(key, dims):
    params = []
    for i in range(len(dims) - 1):
        key, kw, kb = jax.random.split(key, 3)
        fan_in, fan_out = dims[i], dims[i + 1]
        limit = (6.0 / (fan_in + fan_out)) ** 0.5
        w = jax.random.uniform(kw, (fan_in, fan_out), jnp.float32, -limit, limit)
        b = jax.random.uniform(kb, (1, fan_out), jnp.float32, -0.1, 0.1)
        params.append((w, b))
    return params


def _fuse_branches(params_a, params_b):
    """Per-layer block-diagonal fusion of the two parallel (a|b) MLPs."""
    fused = []
    for (wa, ba), (wb, bb) in zip(params_a, params_b):
        w = _block_diag(wa, wb).astype(jnp.bfloat16)   # bf16 weights for the MXU
        b = jnp.concatenate([ba, bb], axis=1)          # f32 bias
        fused.append((w, b))
    return fused


def init_dccae_params(key, n_a, n_b, z_dim, layers):
    k1, k2, k3, k4 = jax.random.split(key, 4)
    enc_a = _init_mlp_params(k1, [n_a] + list(layers) + [z_dim])
    enc_b = _init_mlp_params(k2, [n_b] + list(layers) + [z_dim])
    dec_a = _init_mlp_params(k3, [z_dim] + list(layers[::-1]) + [n_a])
    dec_b = _init_mlp_params(k4, [z_dim] + list(layers[::-1]) + [n_b])
    return dict(
        enc=_fuse_branches(enc_a, enc_b),
        dec=_fuse_branches(dec_a, dec_b),
        dims=dict(n_a=n_a, n_b=n_b, z_dim=z_dim),
    )


# -----------------------------------------------------------------------------
# Forward wrapper: mirrors DCCAE.forward -> (a_hat, b_hat, z_a, z_b)
# -----------------------------------------------------------------------------
def dccae_forward(params, x_a, x_b, *, block_m=None):
    dims = params["dims"]
    n_a, n_b, z_dim = dims["n_a"], dims["n_b"], dims["z_dim"]
    enc, dec = params["enc"], params["dec"]

    in_dim = n_a + n_b        # packed input width (true width, no 128 padding)
    hat_dim = n_a + n_b       # packed reconstruction width
    zz_dim = 2 * z_dim        # packed latent width
    out_dtype = x_a.dtype

    batch = x_a.shape[0]
    # Batch tile: amortize ~0.35us/step overhead with big tiles, rounded to 16
    # (bf16 sublane packing), and sized so the grid has >=2 steps whenever the
    # batch allows it (keeps both v7x TensorCores busy on the "parallel" axis).
    if block_m is None:
        block_m = min(1024, _round_up(max(pl.cdiv(batch, 2), 8), 16))
    block_m = max(16, _round_up(block_m, 16))
    batch_pad = _round_up(batch, block_m)
    grid_m = batch_pad // block_m

    # Packed bf16 input slab [x_a | x_b]: concat + batch-pad + downcast fuse
    # into one cheap wrapper op; halves input DMA bytes into the kernel.
    x = jnp.concatenate([x_a, x_b], axis=1).astype(jnp.bfloat16)
    x = jnp.pad(x, ((0, batch_pad - batch), (0, 0)))

    flat_params = []
    for w, b in list(enc) + list(dec):
        flat_params.append(w)
        flat_params.append(b)

    def act_spec(d):
        # Last dim equals the full array dim -> legal non-128 block width.
        return pl.BlockSpec((block_m, d), lambda i: (i, 0))

    def resident_spec(a):
        # Same block index every grid step -> fetched once, VMEM-resident.
        return pl.BlockSpec(a.shape, lambda i: (0, 0))

    in_specs = [act_spec(in_dim)] + [resident_spec(a) for a in flat_params]
    out_specs = (act_spec(hat_dim), act_spec(zz_dim))
    out_shape = (
        jax.ShapeDtypeStruct((batch_pad, hat_dim), out_dtype),
        jax.ShapeDtypeStruct((batch_pad, zz_dim), out_dtype),
    )

    # Advisory cost estimate (pure host-side int math; jit-safe).
    flops = 0
    transcendentals = 0
    for mlp_params in (enc, dec):
        for li, (w, _) in enumerate(mlp_params):
            flops += 2 * batch_pad * w.shape[0] * w.shape[1]
            if li < len(mlp_params) - 1:
                transcendentals += batch_pad * w.shape[1]
    bytes_accessed = (
        math.prod(x.shape) * x.dtype.itemsize
        + sum(math.prod(a.shape) * a.dtype.itemsize for a in flat_params)
        + sum(math.prod(s.shape) * jnp.dtype(s.dtype).itemsize for s in out_shape)
    )

    # VMEM budget: resident weights + double-buffered activation tiles, with
    # headroom; capped at 48 MiB (safe on v7x's 64 MiB per-TC physical VMEM).
    weight_bytes = sum(math.prod(a.shape) * a.dtype.itemsize for a in flat_params)
    tile_bytes = 2 * block_m * in_dim * 2                                   # input
    tile_bytes += 2 * block_m * (hat_dim + zz_dim) * jnp.dtype(out_dtype).itemsize
    vmem_limit = int(min(48 * 1024 * 1024,
                         max(16 * 1024 * 1024, 8 * (weight_bytes + tile_bytes))))

    kernel = functools.partial(_dccae_kernel, n_enc=len(enc), n_dec=len(dec))

    hat, zz = pl.pallas_call(
        kernel,
        grid=(grid_m,),
        in_specs=in_specs,
        out_specs=out_specs,
        out_shape=out_shape,
        compiler_params=pltpu.CompilerParams(
            dimension_semantics=("parallel",),   # megacore-shardable on v7x
            vmem_limit_bytes=vmem_limit,
        ),
        cost_estimate=pl.CostEstimate(
            flops=flops,
            transcendentals=transcendentals,
            bytes_accessed=bytes_accessed,
        ),
    )(x, *flat_params)

    a_hat = hat[:batch, :n_a]
    b_hat = hat[:batch, n_a:n_a + n_b]
    z_a = zz[:batch, :z_dim]
    z_b = zz[:batch, z_dim:zz_dim]
    return a_hat, b_hat, z_a, z_b


# TODO(synk): DCCAE.loss / calc_cca_loss uses torch.linalg.eigh (symmetric
# eigendecomposition), which has no Pallas TPU equivalent; it is not part of
# forward() and is left unimplemented.


if __name__ == "__main__":
    # Small, deterministic example consistent with the module's shapes.
    batch, n_a, n_b, z_dim = 8, 16, 12, 8
    layers = [32, 16]

    key = jax.random.PRNGKey(0)
    k_params, k_xa, k_xb = jax.random.split(key, 3)

    params = init_dccae_params(k_params, n_a, n_b, z_dim, layers)
    x_a = jax.random.normal(k_xa, (batch, n_a), jnp.float32)
    x_b = jax.random.normal(k_xb, (batch, n_b), jnp.float32)

    outs = dccae_forward(params, x_a, x_b)
    jax.block_until_ready(outs)
    a_hat, b_hat, z_a, z_b = outs

    assert a_hat.shape == (batch, n_a)
    assert b_hat.shape == (batch, n_b)
    assert z_a.shape == (batch, z_dim)
    assert z_b.shape == (batch, z_dim)
    assert all(bool(jnp.isfinite(o).all()) for o in outs)

    print("KERNEL_OK")
</pallas_src>

<mosaic_0001>
module attributes {stable_mosaic.version = 11 : i64} {
  func.func @_dccae_kernel(%arg0: i32, %arg1: memref<16x28xbf16, #tpu.memory_space<vmem>>, %arg2: memref<28x64xbf16, #tpu.memory_space<vmem>>, %arg3: memref<1x64xf32, #tpu.memory_space<vmem>>, %arg4: memref<64x32xbf16, #tpu.memory_space<vmem>>, %arg5: memref<1x32xf32, #tpu.memory_space<vmem>>, %arg6: memref<32x16xbf16, #tpu.memory_space<vmem>>, %arg7: memref<1x16xf32, #tpu.memory_space<vmem>>, %arg8: memref<16x32xbf16, #tpu.memory_space<vmem>>, %arg9: memref<1x32xf32, #tpu.memory_space<vmem>>, %arg10: memref<32x64xbf16, #tpu.memory_space<vmem>>, %arg11: memref<1x64xf32, #tpu.memory_space<vmem>>, %arg12: memref<64x28xbf16, #tpu.memory_space<vmem>>, %arg13: memref<1x28xf32, #tpu.memory_space<vmem>>, %arg14: memref<16x28xf32, #tpu.memory_space<vmem>>, %arg15: memref<16x16xf32, #tpu.memory_space<vmem>>) attributes {dimension_semantics = [#tpu.dimension_semantics<parallel>], iteration_bounds = array<i64: 1>, scalar_prefetch = 0 : i64, scratch_operands = 0 : i64, tpu.core_type = #tpu.core_type<tc>, window_params = [{transform_indices = @transform_0, window_bounds = array<i64: 16, 28>}, {pipeline_mode = #tpu.pipeline_mode<synchronous>, transform_indices = @transform_1, window_bounds = array<i64: 28, 64>}, {pipeline_mode = #tpu.pipeline_mode<synchronous>, transform_indices = @transform_2, window_bounds = array<i64: 1, 64>}, {pipeline_mode = #tpu.pipeline_mode<synchronous>, transform_indices = @transform_3, window_bounds = array<i64: 64, 32>}, {pipeline_mode = #tpu.pipeline_mode<synchronous>, transform_indices = @transform_4, window_bounds = array<i64: 1, 32>}, {pipeline_mode = #tpu.pipeline_mode<synchronous>, transform_indices = @transform_5, window_bounds = array<i64: 32, 16>}, {pipeline_mode = #tpu.pipeline_mode<synchronous>, transform_indices = @transform_6, window_bounds = array<i64: 1, 16>}, {pipeline_mode = #tpu.pipeline_mode<synchronous>, transform_indices = @transform_7, window_bounds = array<i64: 16, 32>}, {pipeline_mode = #tpu.pipeline_mode<synchronous>, transform_indices = @transform_8, window_bounds = array<i64: 1, 32>}, {pipeline_mode = #tpu.pipeline_mode<synchronous>, transform_indices = @transform_9, window_bounds = array<i64: 32, 64>}, {pipeline_mode = #tpu.pipeline_mode<synchronous>, transform_indices = @transform_10, window_bounds = array<i64: 1, 64>}, {pipeline_mode = #tpu.pipeline_mode<synchronous>, transform_indices = @transform_11, window_bounds = array<i64: 64, 28>}, {pipeline_mode = #tpu.pipeline_mode<synchronous>, transform_indices = @transform_12, window_bounds = array<i64: 1, 28>}, {transform_indices = @transform_13, window_bounds = array<i64: 16, 28>}, {transform_indices = @transform_14, window_bounds = array<i64: 16, 16>}]} {
    %c0 = arith.constant 0 : index
    %c0_0 = arith.constant 0 : index
    %0 = vector.load %arg1[%c0, %c0_0] : memref<16x28xbf16, #tpu.memory_space<vmem>>, vector<16x28xbf16>
    %c0_1 = arith.constant 0 : index
    %c0_2 = arith.constant 0 : index
    %1 = vector.load %arg2[%c0_1, %c0_2] : memref<28x64xbf16, #tpu.memory_space<vmem>>, vector<28x64xbf16>
    %cst = arith.constant dense<0.000000e+00> : vector<16x64xf32>
    %2 = tpu.matmul %0, %1, %cst {dimension_numbers = #tpu.dot_dimension_numbers<[1], [0], [0], [1], [0, 0, 1, 1], [], []>} : vector<16x28xbf16>, vector<28x64xbf16>, vector<16x64xf32> -> vector<16x64xf32>
    %c0_3 = arith.constant 0 : index
    %c0_4 = arith.constant 0 : index
    %3 = vector.load %arg3[%c0_3, %c0_4] : memref<1x64xf32, #tpu.memory_space<vmem>>, vector<1x64xf32>
    %4 = vector.broadcast %3 : vector<1x64xf32> to vector<16x64xf32>
    %5 = arith.addf %2, %4 : vector<16x64xf32>
    %6 = arith.negf %5 : vector<16x64xf32>
    %7 = math.exp %6 : vector<16x64xf32>
    %cst_5 = arith.constant 1.000000e+00 : f32
    %8 = vector.broadcast %cst_5 : f32 to vector<16x64xf32>
    %9 = arith.addf %8, %7 : vector<16x64xf32>
    %10 = arith.divf %8, %9 : vector<16x64xf32>
    %11 = arith.truncf %10 : vector<16x64xf32> to vector<16x64xbf16>
    %c0_6 = arith.constant 0 : index
    %c0_7 = arith.constant 0 : index
    %12 = vector.load %arg4[%c0_6, %c0_7] : memref<64x32xbf16, #tpu.memory_space<vmem>>, vector<64x32xbf16>
    %cst_8 = arith.constant dense<0.000000e+00> : vector<16x32xf32>
    %13 = tpu.matmul %11, %12, %cst_8 {dimension_numbers = #tpu.dot_dimension_numbers<[1], [0], [0], [1], [0, 0, 1, 1], [], []>} : vector<16x64xbf16>, vector<64x32xbf16>, vector<16x32xf32> -> vector<16x32xf32>
    %c0_9 = arith.constant 0 : index
    %c0_10 = arith.constant 0 : index
    %14 = vector.load %arg5[%c0_9, %c0_10] : memref<1x32xf32, #tpu.memory_space<vmem>>, vector<1x32xf32>
    %15 = vector.broadcast %14 : vector<1x32xf32> to vector<16x32xf32>
    %16 = arith.addf %13, %15 : vector<16x32xf32>
    %17 = arith.negf %16 : vector<16x32xf32>
    %18 = math.exp %17 : vector<16x32xf32>
    %cst_11 = arith.constant 1.000000e+00 : f32
    %19 = vector.broadcast %cst_11 : f32 to vector<16x32xf32>
    %20 = arith.addf %19, %18 : vector<16x32xf32>
    %21 = arith.divf %19, %20 : vector<16x32xf32>
    %22 = arith.truncf %21 : vector<16x32xf32> to vector<16x32xbf16>
    %c0_12 = arith.constant 0 : index
    %c0_13 = arith.constant 0 : index
    %23 = vector.load %arg6[%c0_12, %c0_13] : memref<32x16xbf16, #tpu.memory_space<vmem>>, vector<32x16xbf16>
    %cst_14 = arith.constant dense<0.000000e+00> : vector<16x16xf32>
    %24 = tpu.matmul %22, %23, %cst_14 {dimension_numbers = #tpu.dot_dimension_numbers<[1], [0], [0], [1], [0, 0, 1, 1], [], []>} : vector<16x32xbf16>, vector<32x16xbf16>, vector<16x16xf32> -> vector<16x16xf32>
    %c0_15 = arith.constant 0 : index
    %c0_16 = arith.constant 0 : index
    %25 = vector.load %arg7[%c0_15, %c0_16] : memref<1x16xf32, #tpu.memory_space<vmem>>, vector<1x16xf32>
    %26 = vector.broadcast %25 : vector<1x16xf32> to vector<16x16xf32>
    %27 = arith.addf %24, %26 : vector<16x16xf32>
    %c0_17 = arith.constant 0 : index
    %c0_18 = arith.constant 0 : index
    %28 = vector.load %arg15[%c0_17, %c0_18] : memref<16x16xf32, #tpu.memory_space<vmem>>, vector<16x16xf32>
    tpu.vector_store %arg15[%c0_17, %c0_18], %27 {strides = array<i32>} : memref<16x16xf32, #tpu.memory_space<vmem>>, vector<16x16xf32>,
    %29 = arith.truncf %27 : vector<16x16xf32> to vector<16x16xbf16>
    %c0_19 = arith.constant 0 : index
    %c0_20 = arith.constant 0 : index
    %30 = vector.load %arg8[%c0_19, %c0_20] : memref<16x32xbf16, #tpu.memory_space<vmem>>, vector<16x32xbf16>
    %cst_21 = arith.constant dense<0.000000e+00> : vector<16x32xf32>
    %31 = tpu.matmul %29, %30, %cst_21 {dimension_numbers = #tpu.dot_dimension_numbers<[1], [0], [0], [1], [0, 0, 1, 1], [], []>} : vector<16x16xbf16>, vector<16x32xbf16>, vector<16x32xf32> -> vector<16x32xf32>
    %c0_22 = arith.constant 0 : index
    %c0_23 = arith.constant 0 : index
    %32 = vector.load %arg9[%c0_22, %c0_23] : memref<1x32xf32, #tpu.memory_space<vmem>>, vector<1x32xf32>
    %33 = vector.broadcast %32 : vector<1x32xf32> to vector<16x32xf32>
    %34 = arith.addf %31, %33 : vector<16x32xf32>
    %35 = arith.negf %34 : vector<16x32xf32>
    %36 = math.exp %35 : vector<16x32xf32>
    %cst_24 = arith.constant 1.000000e+00 : f32
    %37 = vector.broadcast %cst_24 : f32 to vector<16x32xf32>
    %38 = arith.addf %37, %36 : vector<16x32xf32>
    %39 = arith.divf %37, %38 : vector<16x32xf32>
    %40 = arith.truncf %39 : vector<16x32xf32> to vector<16x32xbf16>
    %c0_25 = arith.constant 0 : index
    %c0_26 = arith.constant 0 : index
    %41 = vector.load %arg10[%c0_25, %c0_26] : memref<32x64xbf16, #tpu.memory_space<vmem>>, vector<32x64xbf16>
    %cst_27 = arith.constant dense<0.000000e+00> : vector<16x64xf32>
    %42 = tpu.matmul %40, %41, %cst_27 {dimension_numbers = #tpu.dot_dimension_numbers<[1], [0], [0], [1], [0, 0, 1, 1], [], []>} : vector<16x32xbf16>, vector<32x64xbf16>, vector<16x64xf32> -> vector<16x64xf32>
    %c0_28 = arith.constant 0 : index
    %c0_29 = arith.constant 0 : index
    %43 = vector.load %arg11[%c0_28, %c0_29] : memref<1x64xf32, #tpu.memory_space<vmem>>, vector<1x64xf32>
    %44 = vector.broadcast %43 : vector<1x64xf32> to vector<16x64xf32>
    %45 = arith.addf %42, %44 : vector<16x64xf32>
    %46 = arith.negf %45 : vector<16x64xf32>
    %47 = math.exp %46 : vector<16x64xf32>
    %cst_30 = arith.constant 1.000000e+00 : f32
    %48 = vector.broadcast %cst_30 : f32 to vector<16x64xf32>
    %49 = arith.addf %48, %47 : vector<16x64xf32>
    %50 = arith.divf %48, %49 : vector<16x64xf32>
    %51 = arith.truncf %50 : vector<16x64xf32> to vector<16x64xbf16>
    %c0_31 = arith.constant 0 : index
    %c0_32 = arith.constant 0 : index
    %52 = vector.load %arg12[%c0_31, %c0_32] : memref<64x28xbf16, #tpu.memory_space<vmem>>, vector<64x28xbf16>
    %cst_33 = arith.constant dense<0.000000e+00> : vector<16x28xf32>
    %53 = tpu.matmul %51, %52, %cst_33 {dimension_numbers = #tpu.dot_dimension_numbers<[1], [0], [0], [1], [0, 0, 1, 1], [], []>} : vector<16x64xbf16>, vector<64x28xbf16>, vector<16x28xf32> -> vector<16x28xf32>
    %c0_34 = arith.constant 0 : index
    %c0_35 = arith.constant 0 : index
    %54 = vector.load %arg13[%c0_34, %c0_35] : memref<1x28xf32, #tpu.memory_space<vmem>>, vector<1x28xf32>
    %55 = vector.broadcast %54 : vector<1x28xf32> to vector<16x28xf32>
    %56 = arith.addf %53, %55 : vector<16x28xf32>
    %c0_36 = arith.constant 0 : index
    %c0_37 = arith.constant 0 : index
    %57 = vector.load %arg14[%c0_36, %c0_37] : memref<16x28xf32, #tpu.memory_space<vmem>>, vector<16x28xf32>
    tpu.vector_store %arg14[%c0_36, %c0_37], %56 {strides = array<i32>} : memref<16x28xf32, #tpu.memory_space<vmem>>, vector<16x28xf32>,
    return
  }
  func.func @transform_0(%arg0: i32) -> (i32, i32) {
    %c0_i32 = arith.constant 0 : i32
    %c0_i32_0 = arith.constant 0 : i32
    return %arg0, %c0_i32 : i32, i32
  }
  func.func @transform_1(%arg0: i32) -> (i32, i32) {
    %c0_i32 = arith.constant 0 : i32
    %c0_i32_0 = arith.constant 0 : i32
    %c0_i32_1 = arith.constant 0 : i32
    return %c0_i32, %c0_i32_0 : i32, i32
  }
  func.func @transform_2(%arg0: i32) -> (i32, i32) {
    %c0_i32 = arith.constant 0 : i32
    %c0_i32_0 = arith.constant 0 : i32
    %c0_i32_1 = arith.constant 0 : i32
    return %c0_i32, %c0_i32_0 : i32, i32
  }
  func.func @transform_3(%arg0: i32) -> (i32, i32) {
    %c0_i32 = arith.constant 0 : i32
    %c0_i32_0 = arith.constant 0 : i32
    %c0_i32_1 = arith.constant 0 : i32
    return %c0_i32, %c0_i32_0 : i32, i32
  }
  func.func @transform_4(%arg0: i32) -> (i32, i32) {
    %c0_i32 = arith.constant 0 : i32
    %c0_i32_0 = arith.constant 0 : i32
    %c0_i32_1 = arith.constant 0 : i32
    return %c0_i32, %c0_i32_0 : i32, i32
  }
  func.func @transform_5(%arg0: i32) -> (i32, i32) {
    %c0_i32 = arith.constant 0 : i32
    %c0_i32_0 = arith.constant 0 : i32
    %c0_i32_1 = arith.constant 0 : i32
    return %c0_i32, %c0_i32_0 : i32, i32
  }
  func.func @transform_6(%arg0: i32) -> (i32, i32) {
    %c0_i32 = arith.constant 0 : i32
    %c0_i32_0 = arith.constant 0 : i32
    %c0_i32_1 = arith.constant 0 : i32
    return %c0_i32, %c0_i32_0 : i32, i32
  }
  func.func @transform_7(%arg0: i32) -> (i32, i32) {
    %c0_i32 = arith.constant 0 : i32
    %c0_i32_0 = arith.constant 0 : i32
    %c0_i32_1 = arith.constant 0 : i32
    return %c0_i32, %c0_i32_0 : i32, i32
  }
  func.func @transform_8(%arg0: i32) -> (i32, i32) {
    %c0_i32 = arith.constant 0 : i32
    %c0_i32_0 = arith.constant 0 : i32
    %c0_i32_1 = arith.constant 0 : i32
    return %c0_i32, %c0_i32_0 : i32, i32
  }
  func.func @transform_9(%arg0: i32) -> (i32, i32) {
    %c0_i32 = arith.constant 0 : i32
    %c0_i32_0 = arith.constant 0 : i32
    %c0_i32_1 = arith.constant 0 : i32
    return %c0_i32, %c0_i32_0 : i32, i32
  }
  func.func @transform_10(%arg0: i32) -> (i32, i32) {
    %c0_i32 = arith.constant 0 : i32
    %c0_i32_0 = arith.constant 0 : i32
    %c0_i32_1 = arith.constant 0 : i32
    return %c0_i32, %c0_i32_0 : i32, i32
  }
  func.func @transform_11(%arg0: i32) -> (i32, i32) {
    %c0_i32 = arith.constant 0 : i32
    %c0_i32_0 = arith.constant 0 : i32
    %c0_i32_1 = arith.constant 0 : i32
    return %c0_i32, %c0_i32_0 : i32, i32
  }
  func.func @transform_12(%arg0: i32) -> (i32, i32) {
    %c0_i32 = arith.constant 0 : i32
    %c0_i32_0 = arith.constant 0 : i32
    %c0_i32_1 = arith.constant 0 : i32
    return %c0_i32, %c0_i32_0 : i32, i32
  }
  func.func @transform_13(%arg0: i32) -> (i32, i32) {
    %c0_i32 = arith.constant 0 : i32
    %c0_i32_0 = arith.constant 0 : i32
    return %arg0, %c0_i32 : i32, i32
  }
  func.func @transform_14(%arg0: i32) -> (i32, i32) {
    %c0_i32 = arith.constant 0 : i32
    %c0_i32_0 = arith.constant 0 : i32
    return %arg0, %c0_i32 : i32, i32
  }
}

</mosaic_0001>

<llo_original>
// kernel: tpu_custom_call.1
$region0: #{tpu_custom_call.1}
  #allocation0 [shape = 'u32[]', space=smem, size = 0x4, offset = 0x4, fixed_abs, tag = 'smem constant byte address 0x4 - core index']
  #allocation1 [shape = 'u32[144,128]{1,0:T(1,128)}', space=vmem, size = 0x12000, scoped, tag = 'internal scratch']
  %s0 = inlined_call_operand.vmem [shape: bf16[16,28], index: 0, kind: input, shape index: {}]
  %s1 = inlined_call_operand.vmem [shape: bf16[28,64], index: 1, kind: input, shape index: {}]
  %s2 = inlined_call_operand.vmem [shape: f32[1,64], index: 2, kind: input, shape index: {}]
  %s3 = inlined_call_operand.vmem [shape: bf16[64,32], index: 3, kind: input, shape index: {}]
  %s4 = inlined_call_operand.vmem [shape: f32[1,32], index: 4, kind: input, shape index: {}]
  %s5 = inlined_call_operand.vmem [shape: bf16[32,16], index: 5, kind: input, shape index: {}]
  %s6 = inlined_call_operand.vmem [shape: f32[1,16], index: 6, kind: input, shape index: {}]
  %s7 = inlined_call_operand.vmem [shape: bf16[16,32], index: 7, kind: input, shape index: {}]
  %s8 = inlined_call_operand.vmem [shape: f32[1,32], index: 8, kind: input, shape index: {}]
  %s9 = inlined_call_operand.vmem [shape: bf16[32,64], index: 9, kind: input, shape index: {}]
  %s10 = inlined_call_operand.vmem [shape: f32[1,64], index: 10, kind: input, shape index: {}]
  %s11 = inlined_call_operand.vmem [shape: bf16[64,28], index: 11, kind: input, shape index: {}]
  %s12 = inlined_call_operand.vmem [shape: f32[1,28], index: 12, kind: input, shape index: {}]
  %s13 = inlined_call_operand.hbm [shape: f32[16,28], index: 13, kind: output, shape index: {0}]
  %s14 = inlined_call_operand.hbm [shape: f32[16,16], index: 14, kind: output, shape index: {1}]
  %15 = xla_tuple %s13, %s14
  %s16 = sld [smem:[#allocation0]]
  $region70: #{tpu_custom_call.1} parent=0
    _
  %s18 = ssub.s32 1, %s16
  %s19 = scalar_select 0, %s18, %s16
  $region1: #{tpu_custom_call.1} parent=0
    #allocation2 [shape = 'u8[8192]{0}', space=vmem, size = 0x2000, scoped, tag = 'output window, operand 0, single buffered']
    #allocation3 [shape = 's32[1]{0}', space=sflag, size = 0x4, scoped, tag = 'scoped memory for tpu_custom_call.1']
    #allocation4 [shape = 'u8[8192]{0}', space=vmem, size = 0x2000, scoped, tag = 'output window, operand 1, single buffered']
    #allocation5 [shape = 's32[1]{0}', space=sflag, size = 0x4, scoped, tag = 'scoped memory for tpu_custom_call.1']
    %20 = vsyncpa [#allocation3], 0
    %21 = vsyncpa [#allocation5], 0
    // Predicated region
    $region2: #{tpu_custom_call.1} parent=1 // pred_check
      _
    $region3: #{tpu_custom_call.1} parent=1 // pred_check_branch
      %23 = sbr.rel (0) target = $region5
    $region4: #{tpu_custom_call.1} parent=1 // pred_region
      _
    $region5: #{tpu_custom_call.1} parent=1 // pred_fallthru
      _
    // Predicated region
    $region6: #{tpu_custom_call.1} parent=1 // pred_check
      _
    $region7: #{tpu_custom_call.1} parent=1 // pred_check_branch
      %25 = sbr.rel (0) target = $region9
    $region8: #{tpu_custom_call.1} parent=1 // pred_region
      _
    $region9: #{tpu_custom_call.1} parent=1 // pred_fallthru
      _
    // Predicated region
    $region10: #{tpu_custom_call.1} parent=1 // pred_check
      _
    $region11: #{tpu_custom_call.1} parent=1 // pred_check_branch
      %27 = sbr.rel (0) target = $region13
    $region12: #{tpu_custom_call.1} parent=1 // pred_region
      _
    $region13: #{tpu_custom_call.1} parent=1 // pred_fallthru
      _
    // Predicated region
    $region14: #{tpu_custom_call.1} parent=1 // pred_check
      _
    $region15: #{tpu_custom_call.1} parent=1 // pred_check_branch
      %29 = sbr.rel (0) target = $region17
    $region16: #{tpu_custom_call.1} parent=1 // pred_region
      _
    $region17: #{tpu_custom_call.1} parent=1 // pred_fallthru
      _
    // Predicated region
    $region18: #{tpu_custom_call.1} parent=1 // pred_check
      _
    $region19: #{tpu_custom_call.1} parent=1 // pred_check_branch
      %31 = sbr.rel (0) target = $region21
    $region20: #{tpu_custom_call.1} parent=1 // pred_region
      _
    $region21: #{tpu_custom_call.1} parent=1 // pred_fallthru
      _
    // Predicated region
    $region22: #{tpu_custom_call.1} parent=1 // pred_check
      _
    $region23: #{tpu_custom_call.1} parent=1 // pred_check_branch
      %33 = sbr.rel (0) target = $region25
    $region24: #{tpu_custom_call.1} parent=1 // pred_region
      _
    $region25: #{tpu_custom_call.1} parent=1 // pred_fallthru
      _
    // Predicated region
    $region26: #{tpu_custom_call.1} parent=1 // pred_check
      _
    $region27: #{tpu_custom_call.1} parent=1 // pred_check_branch
      %35 = sbr.rel (0) target = $region29
    $region28: #{tpu_custom_call.1} parent=1 // pred_region
      _
    $region29: #{tpu_custom_call.1} parent=1 // pred_fallthru
      _
    // Predicated region
    $region30: #{tpu_custom_call.1} parent=1 // pred_check
      _
    $region31: #{tpu_custom_call.1} parent=1 // pred_check_branch
      %37 = sbr.rel (0) target = $region33
    $region32: #{tpu_custom_call.1} parent=1 // pred_region
      _
    $region33: #{tpu_custom_call.1} parent=1 // pred_fallthru
      _
    // Predicated region
    $region34: #{tpu_custom_call.1} parent=1 // pred_check
      _
    $region35: #{tpu_custom_call.1} parent=1 // pred_check_branch
      %39 = sbr.rel (0) target = $region37
    $region36: #{tpu_custom_call.1} parent=1 // pred_region
      _
    $region37: #{tpu_custom_call.1} parent=1 // pred_fallthru
      _
    // Predicated region
    $region38: #{tpu_custom_call.1} parent=1 // pred_check
      _
    $region39: #{tpu_custom_call.1} parent=1 // pred_check_branch
      %41 = sbr.rel (0) target = $region41
    $region40: #{tpu_custom_call.1} parent=1 // pred_region
      _
    $region41: #{tpu_custom_call.1} parent=1 // pred_fallthru
      _
    // Predicated region
    $region42: #{tpu_custom_call.1} parent=1 // pred_check
      _
    $region43: #{tpu_custom_call.1} parent=1 // pred_check_branch
      %43 = sbr.rel (0) target = $region45
    $region44: #{tpu_custom_call.1} parent=1 // pred_region
      _
    $region45: #{tpu_custom_call.1} parent=1 // pred_fallthru
      _
    // Predicated region
    $region46: #{tpu_custom_call.1} parent=1 // pred_check
      _
    $region47: #{tpu_custom_call.1} parent=1 // pred_check_branch
      %45 = sbr.rel (0) target = $region49
    $region48: #{tpu_custom_call.1} parent=1 // pred_region
      _
    $region49: #{tpu_custom_call.1} parent=1 // pred_fallthru
      _
    // Predicated region
    $region50: #{tpu_custom_call.1} parent=1 // pred_check
      _
    $region51: #{tpu_custom_call.1} parent=1 // pred_check_branch
      %47 = sbr.rel (0) target = $region53
    $region52: #{tpu_custom_call.1} parent=1 // pred_region
      _
    $region53: #{tpu_custom_call.1} parent=1 // pred_fallthru
      _
    %v49 = vld [vmem:[%s0] sm:$0xf]
    %v50 = vld [vmem:[%s0 + $0x4] sm:$0xf]
    %v51 = vld [vmem:[%s1] sm:$0xf]
    %v52 = vld [vmem:[%s1 + $0x4] sm:$0xf]
    %v53 = vld [vmem:[%s1 + $0x8] sm:$0xf]
    %v54 = vld [vmem:[%s1 + $0xc] sm:$0x3]
    %v55 = vld [vmem:[%s2] sm:$0x1]
    %v57 = vlaneseq
    %v58 = vshrl.u32 %v57, 7
    %v59 = vsub.s32 0, %v58
    %v60 = vrot.slane %v55, %v59
    %v64 = vunpack.c.l.b16 %v49
    %v65 = vunpack.c.l.b16 %v50
    %v66 = vpack.c.b16 %v65, %v64
    %v71 = vunpack.c.l.b16 %v51
    %v72 = vunpack.c.l.b16 %v52
    %v73 = vunpack.c.l.b16 %v53
    %v74 = vunpack.c.l.b16 %v54
    %v75 = vpack.c.b16 %v72, %v71
    %v76 = vpack.c.b16 %v74, %v73
    %vm78 = vcmask 228352
    %v80 = vsel %vm78, %v66, 0
    %vm82 = vcmask 1045504
    %v84 = vsel %vm82, %v76, 0
    %86 = vmatprep.subr.bf16.mxu0 0
    %87 = vmatpush1.bf16.msra.mxu0 %v75
    %88 = vmatprep.subr.bf16.mxu0 0
    %89 = vmatpush1.bf16.msra.mxu0 %v84
    %90 = vmatprep.subr.bf16.mxu0 0
    %91 = vmatpush1.bf16.msra.mxu0 0
    %92 = vmatprep.subr.bf16.mxu0 0
    %93 = vmatpush1.bf16.msra.mxu0 0
    %94 = vmatprep.subr.bf16.mxu0 0
    %95 = vmatpush1.bf16.msra.mxu0 0
    %96 = vmatprep.subr.bf16.mxu0 0
    %97 = vmatpush1.bf16.msra.mxu0 0
    %98 = vmatprep.subr.bf16.mxu0 0
    %99 = vmatpush1.bf16.msra.mxu0 0
    %100 = vmatprep.subr.bf16.mxu0 0
    %101 = vmatpush1.bf16.msra.mxu0 0
    %102 = vmatprep.subr.bf16.mxu0 0
    %103 = vmatpush1.bf16.msra.mxu0 0
    %104 = vmatprep.subr.bf16.mxu0 0
    %105 = vmatpush1.bf16.msra.mxu0 0
    %106 = vmatprep.subr.bf16.mxu0 0
    %107 = vmatpush1.bf16.msra.mxu0 0
    %108 = vmatprep.subr.bf16.mxu0 0
    %109 = vmatpush1.bf16.msra.mxu0 0
    %110 = vmatprep.subr.bf16.mxu0 0
    %111 = vmatpush1.bf16.msra.mxu0 0
    %112 = vmatprep.subr.bf16.mxu0 0
    %113 = vmatpush1.bf16.msra.mxu0 0
    %114 = vmatprep.subr.bf16.mxu0 0
    %115 = vmatpush1.bf16.msra.mxu0 0
    %116 = vmatprep.subr.bf16.mxu0 0
    %117 = vmatpush1.bf16.msra.mxu0 0
    %118 = vmatprep.mubr.bf16.mxu0 0
    %119 = vmatmul.mubr.bf16.gmra.mrb[0].mxu0 %v80
    %v120 = vpop.f32.mrb[0].mxu0
    %v121 = vadd.f32 %v60, %v120
    %v122 = vpop.f32.mrb[0].mxu0
    %v123 = vpop.f32.mrb[0].mxu0
    %v124 = vadd.f32 %v60, %v123
    %v125 = vpop.f32.mrb[0].mxu0
    %126 = vdwg.mxu0
    %v127 = vxor.u32 %v121, 2147483648
    %v128 = vxor.u32 %v124, 2147483648
    %v129 = vmul.f32 %v127, 1.442695
    %v130 = vpow.pop %v129
    %v131 = vmul.f32 %v128, 1.442695
    %v132 = vpow.pop %v131
    %v133 = vadd.f32 %v130, 1.0
    %v134 = vadd.f32 %v132, 1.0
    %v135 = vrcp.pop %v133
    %v136 = vmul.f32 1.0, %v135
    %v137 = vrcp.pop %v134
    %v138 = vmul.f32 1.0, %v137
    %v139 = vpack.c.bf16 %v138, %v136
    %v140 = vld [vmem:[%s3] sm:$0xf]
    %v141 = vld [vmem:[%s3 + $0x4] sm:$0xf]
    %v142 = vld [vmem:[%s3 + $0x8] sm:$0xf]
    %v143 = vld [vmem:[%s3 + $0xc] sm:$0xf]
    %v144 = vld [vmem:[%s3 + $0x10] sm:$0xf]
    %v145 = vld [vmem:[%s3 + $0x14] sm:$0xf]
    %v146 = vld [vmem:[%s3 + $0x18] sm:$0xf]
    %v147 = vld [vmem:[%s3 + $0x1c] sm:$0xf]
    %v148 = vld [vmem:[%s4] sm:$0x1]
    %v150 = vlaneseq
    %v151 = vshrl.u32 %v150, 7
    %v152 = vsub.s32 0, %v151
    %v153 = vrot.slane %v148, %v152
    %v163 = vunpack.c.l.b16 %v140
    %v164 = vunpack.c.l.b16 %v141
    %v165 = vunpack.c.l.b16 %v142
    %v166 = vunpack.c.l.b16 %v143
    %v167 = vunpack.c.l.b16 %v144
    %v168 = vunpack.c.l.b16 %v145
    %v169 = vunpack.c.l.b16 %v146
    %v170 = vunpack.c.l.b16 %v147
    %v171 = vpack.c.b16 %v164, %v163
    %v172 = vpack.c.b16 %v166, %v165
    %v173 = vpack.c.b16 %v168, %v167
    %v174 = vpack.c.b16 %v170, %v169
    %vm179 = vcmask 523264
    %v181 = vsel %vm179, %v139, 0
    %183 = vmatprep.subr.bf16.mxu0 0
    %184 = vmatpush1.bf16.msra.mxu0 %v171
    %185 = vmatprep.subr.bf16.mxu0 0
    %186 = vmatpush1.bf16.msra.mxu0 %v172
    %187 = vmatprep.subr.bf16.mxu0 0
    %188 = vmatpush1.bf16.msra.mxu0 %v173
    %189 = vmatprep.subr.bf16.mxu0 0
    %190 = vmatpush1.bf16.msra.mxu0 %v174
    %191 = vmatprep.subr.bf16.mxu0 0
    %192 = vmatpush1.bf16.msra.mxu0 0
    %193 = vmatprep.subr.bf16.mxu0 0
    %194 = vmatpush1.bf16.msra.mxu0 0
    %195 = vmatprep.subr.bf16.mxu0 0
    %196 = vmatpush1.bf16.msra.mxu0 0
    %197 = vmatprep.subr.bf16.mxu0 0
    %198 = vmatpush1.bf16.msra.mxu0 0
    %199 = vmatprep.subr.bf16.mxu0 0
    %200 = vmatpush1.bf16.msra.mxu0 0
    %201 = vmatprep.subr.bf16.mxu0 0
    %202 = vmatpush1.bf16.msra.mxu0 0
    %203 = vmatprep.subr.bf16.mxu0 0
    %204 = vmatpush1.bf16.msra.mxu0 0
    %205 = vmatprep.subr.bf16.mxu0 0
    %206 = vmatpush1.bf16.msra.mxu0 0
    %207 = vmatprep.subr.bf16.mxu0 0
    %208 = vmatpush1.bf16.msra.mxu0 0
    %209 = vmatprep.subr.bf16.mxu0 0
    %210 = vmatpush1.bf16.msra.mxu0 0
    %211 = vmatprep.subr.bf16.mxu0 0
    %212 = vmatpush1.bf16.msra.mxu0 0
    %213 = vmatprep.subr.bf16.mxu0 0
    %214 = vmatpush1.bf16.msra.mxu0 0
    %215 = vmatprep.mubr.bf16.mxu0 0
    %216 = vmatmul.mubr.bf16.gmra.mrb[0].mxu0 %v181
    %v217 = vpop.f32.mrb[0].mxu0
    %v218 = vadd.f32 %v153, %v217
    %v219 = vpop.f32.mrb[0].mxu0
    %v220 = vpop.f32.mrb[0].mxu0
    %v221 = vadd.f32 %v153, %v220
    %v222 = vpop.f32.mrb[0].mxu0
    %223 = vdwg.mxu0
    %v224 = vxor.u32 %v218, 2147483648
    %v225 = vxor.u32 %v221, 2147483648
    %v226 = vmul.f32 %v224, 1.442695
    %v227 = vpow.pop %v226
    %v228 = vmul.f32 %v225, 1.442695
    %v229 = vpow.pop %v228
    %v230 = vadd.f32 %v227, 1.0
    %v231 = vadd.f32 %v229, 1.0
    %v232 = vrcp.pop %v230
    %v233 = vmul.f32 1.0, %v232
    %v234 = vrcp.pop %v231
    %v235 = vmul.f32 1.0, %v234
    %v236 = vpack.c.bf16 %v235, %v233
    %v237 = vld [vmem:[%s5] sm:$0xf]
    %v238 = vld [vmem:[%s5 + $0x4] sm:$0xf]
    %v239 = vld [vmem:[%s5 + $0x8] sm:$0xf]
    %v240 = vld [vmem:[%s5 + $0xc] sm:$0xf]
    %v241 = vld [vmem:[%s6] sm:$0x1]
    %v243 = vlaneseq
    %v244 = vshrl.u32 %v243, 7
    %v245 = vsub.s32 0, %v244
    %v246 = vrot.slane %v241, %v245
    %v252 = vunpack.c.l.b16 %v237
    %v253 = vunpack.c.l.b16 %v238
    %v254 = vunpack.c.l.b16 %v239
    %v255 = vunpack.c.l.b16 %v240
    %v256 = vpack.c.b16 %v253, %v252
    %v257 = vpack.c.b16 %v255, %v254
    %vm260 = vcmask 261120
    %v262 = vsel %vm260, %v236, 0
    %264 = vmatprep.subr.bf16.mxu0 0
    %265 = vmatpush1.bf16.msra.mxu0 %v256
    %266 = vmatprep.subr.bf16.mxu0 0
    %267 = vmatpush1.bf16.msra.mxu0 %v257
    %268 = vmatprep.subr.bf16.mxu0 0
    %269 = vmatpush1.bf16.msra.mxu0 0
    %270 = vmatprep.subr.bf16.mxu0 0
    %271 = vmatpush1.bf16.msra.mxu0 0
    %272 = vmatprep.subr.bf16.mxu0 0
    %273 = vmatpush1.bf16.msra.mxu0 0
    %274 = vmatprep.subr.bf16.mxu0 0
    %275 = vmatpush1.bf16.msra.mxu0 0
    %276 = vmatprep.subr.bf16.mxu0 0
    %277 = vmatpush1.bf16.msra.mxu0 0
    %278 = vmatprep.subr.bf16.mxu0 0
    %279 = vmatpush1.bf16.msra.mxu0 0
    %280 = vmatprep.subr.bf16.mxu0 0
    %281 = vmatpush1.bf16.msra.mxu0 0
    %282 = vmatprep.subr.bf16.mxu0 0
    %283 = vmatpush1.bf16.msra.mxu0 0
    %284 = vmatprep.subr.bf16.mxu0 0
    %285 = vmatpush1.bf16.msra.mxu0 0
    %286 = vmatprep.subr.bf16.mxu0 0
    %287 = vmatpush1.bf16.msra.mxu0 0
    %288 = vmatprep.subr.bf16.mxu0 0
    %289 = vmatpush1.bf16.msra.mxu0 0
    %290 = vmatprep.subr.bf16.mxu0 0
    %291 = vmatpush1.bf16.msra.mxu0 0
    %292 = vmatprep.subr.bf16.mxu0 0
    %293 = vmatpush1.bf16.msra.mxu0 0
    %294 = vmatprep.subr.bf16.mxu0 0
    %295 = vmatpush1.bf16.msra.mxu0 0
    %296 = vmatprep.mubr.bf16.mxu0 0
    %297 = vmatmul.mubr.bf16.gmra.mrb[0].mxu0 %v262
    %v298 = vpop.f32.mrb[0].mxu0
    %v299 = vadd.f32 %v246, %v298
    %v300 = vpop.f32.mrb[0].mxu0
    %v301 = vpop.f32.mrb[0].mxu0
    %v302 = vadd.f32 %v246, %v301
    %v303 = vpop.f32.mrb[0].mxu0
    %304 = vdwg.mxu0
    %vm305 = vcmask 130048
    %306 = vst.msk [vmem:[#allocation4] sm:$0xff] %vm305, %v299
    %307 = vst.msk [vmem:[#allocation4 + $0x8] sm:$0xff] %vm305, %v302
    %v308 = vpack.c.bf16 %v302, %v299
    %v309 = vld [vmem:[%s7] sm:$0xf]
    %v310 = vld [vmem:[%s7 + $0x4] sm:$0xf]
    %v311 = vld [vmem:[%s8] sm:$0x1]
    %v313 = vlaneseq
    %v314 = vshrl.u32 %v313, 7
    %v315 = vsub.s32 0, %v314
    %v316 = vrot.slane %v311, %v315
    %v320 = vunpack.c.l.b16 %v309
    %v321 = vunpack.c.l.b16 %v310
    %v322 = vpack.c.b16 %v321, %v320
    %v325 = vsel %vm305, %v308, 0
    %327 = vmatprep.subr.bf16.mxu0 0
    %328 = vmatpush1.bf16.msra.mxu0 %v322
    %329 = vmatprep.subr.bf16.mxu0 0
    %330 = vmatpush1.bf16.msra.mxu0 0
    %331 = vmatprep.subr.bf16.mxu0 0
    %332 = vmatpush1.bf16.msra.mxu0 0
    %333 = vmatprep.subr.bf16.mxu0 0
    %334 = vmatpush1.bf16.msra.mxu0 0
    %335 = vmatprep.subr.bf16.mxu0 0
    %336 = vmatpush1.bf16.msra.mxu0 0
    %337 = vmatprep.subr.bf16.mxu0 0
    %338 = vmatpush1.bf16.msra.mxu0 0
    %339 = vmatprep.subr.bf16.mxu0 0
    %340 = vmatpush1.bf16.msra.mxu0 0
    %341 = vmatprep.subr.bf16.mxu0 0
    %342 = vmatpush1.bf16.msra.mxu0 0
    %343 = vmatprep.subr.bf16.mxu0 0
    %344 = vmatpush1.bf16.msra.mxu0 0
    %345 = vmatprep.subr.bf16.mxu0 0
    %346 = vmatpush1.bf16.msra.mxu0 0
    %347 = vmatprep.subr.bf16.mxu0 0
    %348 = vmatpush1.bf16.msra.mxu0 0
    %349 = vmatprep.subr.bf16.mxu0 0
    %350 = vmatpush1.bf16.msra.mxu0 0
    %351 = vmatprep.subr.bf16.mxu0 0
    %352 = vmatpush1.bf16.msra.mxu0 0
    %353 = vmatprep.subr.bf16.mxu0 0
    %354 = vmatpush1.bf16.msra.mxu0 0
    %355 = vmatprep.subr.bf16.mxu0 0
    %356 = vmatpush1.bf16.msra.mxu0 0
    %357 = vmatprep.subr.bf16.mxu0 0
    %358 = vmatpush1.bf16.msra.mxu0 0
    %359 = vmatprep.mubr.bf16.mxu0 0
    %360 = vmatmul.mubr.bf16.gmra.mrb[0].mxu0 %v325
    %v361 = vpop.f32.mrb[0].mxu0
    %v362 = vadd.f32 %v316, %v361
    %v363 = vpop.f32.mrb[0].mxu0
    %v364 = vpop.f32.mrb[0].mxu0
    %v365 = vadd.f32 %v316, %v364
    %v366 = vpop.f32.mrb[0].mxu0
    %367 = vdwg.mxu0
    %v368 = vxor.u32 %v362, 2147483648
    %v369 = vxor.u32 %v365, 2147483648
    %v370 = vmul.f32 %v368, 1.442695
    %v371 = vpow.pop %v370
    %v372 = vmul.f32 %v369, 1.442695
    %v373 = vpow.pop %v372
    %v374 = vadd.f32 %v371, 1.0
    %v375 = vadd.f32 %v373, 1.0
    %v376 = vrcp.pop %v374
    %v377 = vmul.f32 1.0, %v376
    %v378 = vrcp.pop %v375
    %v379 = vmul.f32 1.0, %v378
    %v380 = vpack.c.bf16 %v379, %v377
    %v381 = vld [vmem:[%s9] sm:$0xf]
    %v382 = vld [vmem:[%s9 + $0x4] sm:$0xf]
    %v383 = vld [vmem:[%s9 + $0x8] sm:$0xf]
    %v384 = vld [vmem:[%s9 + $0xc] sm:$0xf]
    %v385 = vld [vmem:[%s10] sm:$0x1]
    %v387 = vlaneseq
    %v388 = vshrl.u32 %v387, 7
    %v389 = vsub.s32 0, %v388
    %v390 = vrot.slane %v385, %v389
    %v396 = vunpack.c.l.b16 %v381
    %v397 = vunpack.c.l.b16 %v382
    %v398 = vunpack.c.l.b16 %v383
    %v399 = vunpack.c.l.b16 %v384
    %v400 = vpack.c.b16 %v397, %v396
    %v401 = vpack.c.b16 %v399, %v398
    %v405 = vsel %vm260, %v380, 0
    %407 = vmatprep.subr.bf16.mxu0 0
    %408 = vmatpush1.bf16.msra.mxu0 %v400
    %409 = vmatprep.subr.bf16.mxu0 0
    %410 = vmatpush1.bf16.msra.mxu0 %v401
    %411 = vmatprep.subr.bf16.mxu0 0
    %412 = vmatpush1.bf16.msra.mxu0 0
    %413 = vmatprep.subr.bf16.mxu0 0
    %414 = vmatpush1.bf16.msra.mxu0 0
    %415 = vmatprep.subr.bf16.mxu0 0
    %416 = vmatpush1.bf16.msra.mxu0 0
    %417 = vmatprep.subr.bf16.mxu0 0
    %418 = vmatpush1.bf16.msra.mxu0 0
    %419 = vmatprep.subr.bf16.mxu0 0
    %420 = vmatpush1.bf16.msra.mxu0 0
    %421 = vmatprep.subr.bf16.mxu0 0
    %422 = vmatpush1.bf16.msra.mxu0 0
    %423 = vmatprep.subr.bf16.mxu0 0
    %424 = vmatpush1.bf16.msra.mxu0 0
    %425 = vmatprep.subr.bf16.mxu0 0
    %426 = vmatpush1.bf16.msra.mxu0 0
    %427 = vmatprep.subr.bf16.mxu0 0
    %428 = vmatpush1.bf16.msra.mxu0 0
    %429 = vmatprep.subr.bf16.mxu0 0
    %430 = vmatpush1.bf16.msra.mxu0 0
    %431 = vmatprep.subr.bf16.mxu0 0
    %432 = vmatpush1.bf16.msra.mxu0 0
    %433 = vmatprep.subr.bf16.mxu0 0
    %434 = vmatpush1.bf16.msra.mxu0 0
    %435 = vmatprep.subr.bf16.mxu0 0
    %436 = vmatpush1.bf16.msra.mxu0 0
    %437 = vmatprep.subr.bf16.mxu0 0
    %438 = vmatpush1.bf16.msra.mxu0 0
    %439 = vmatprep.mubr.bf16.mxu0 0
    %440 = vmatmul.mubr.bf16.gmra.mrb[0].mxu0 %v405
    %v441 = vpop.f32.mrb[0].mxu0
    %v442 = vadd.f32 %v390, %v441
    %v443 = vpop.f32.mrb[0].mxu0
    %v444 = vpop.f32.mrb[0].mxu0
    %v445 = vadd.f32 %v390, %v444
    %v446 = vpop.f32.mrb[0].mxu0
    %447 = vdwg.mxu0
    %v448 = vxor.u32 %v442, 2147483648
    %v449 = vxor.u32 %v445, 2147483648
    %v450 = vmul.f32 %v448, 1.442695
    %v451 = vpow.pop %v450
    %v452 = vmul.f32 %v449, 1.442695
    %v453 = vpow.pop %v452
    %v454 = vadd.f32 %v451, 1.0
    %v455 = vadd.f32 %v453, 1.0
    %v456 = vrcp.pop %v454
    %v457 = vmul.f32 1.0, %v456
    %v458 = vrcp.pop %v455
    %v459 = vmul.f32 1.0, %v458
    %v460 = vpack.c.bf16 %v459, %v457
    %v461 = vld [vmem:[%s11] sm:$0xf]
    %v462 = vld [vmem:[%s11 + $0x4] sm:$0xf]
    %v463 = vld [vmem:[%s11 + $0x8] sm:$0xf]
    %v464 = vld [vmem:[%s11 + $0xc] sm:$0xf]
    %v465 = vld [vmem:[%s11 + $0x10] sm:$0xf]
    %v466 = vld [vmem:[%s11 + $0x14] sm:$0xf]
    %v467 = vld [vmem:[%s11 + $0x18] sm:$0xf]
    %v468 = vld [vmem:[%s11 + $0x1c] sm:$0xf]
    %v469 = vld [vmem:[%s12] sm:$0x1]
    %v471 = vlaneseq
    %v472 = vshrl.u32 %v471, 7
    %v473 = vsub.s32 0, %v472
    %v474 = vrot.slane %v469, %v473
    %v484 = vunpack.c.l.b16 %v461
    %v485 = vunpack.c.l.b16 %v462
    %v486 = vunpack.c.l.b16 %v463
    %v487 = vunpack.c.l.b16 %v464
    %v488 = vunpack.c.l.b16 %v465
    %v489 = vunpack.c.l.b16 %v466
    %v490 = vunpack.c.l.b16 %v467
    %v491 = vunpack.c.l.b16 %v468
    %v492 = vpack.c.b16 %v485, %v484
    %v493 = vpack.c.b16 %v487, %v486
    %v494 = vpack.c.b16 %v489, %v488
    %v495 = vpack.c.b16 %v491, %v490
    %v501 = vsel %vm179, %v460, 0
    %503 = vmatprep.subr.bf16.mxu0 0
    %504 = vmatpush1.bf16.msra.mxu0 %v492
    %505 = vmatprep.subr.bf16.mxu0 0
    %506 = vmatpush1.bf16.msra.mxu0 %v493
    %507 = vmatprep.subr.bf16.mxu0 0
    %508 = vmatpush1.bf16.msra.mxu0 %v494
    %509 = vmatprep.subr.bf16.mxu0 0
    %510 = vmatpush1.bf16.msra.mxu0 %v495
    %511 = vmatprep.subr.bf16.mxu0 0
    %512 = vmatpush1.bf16.msra.mxu0 0
    %513 = vmatprep.subr.bf16.mxu0 0
    %514 = vmatpush1.bf16.msra.mxu0 0
    %515 = vmatprep.subr.bf16.mxu0 0
    %516 = vmatpush1.bf16.msra.mxu0 0
    %517 = vmatprep.subr.bf16.mxu0 0
    %518 = vmatpush1.bf16.msra.mxu0 0
    %519 = vmatprep.subr.bf16.mxu0 0
    %520 = vmatpush1.bf16.msra.mxu0 0
    %521 = vmatprep.subr.bf16.mxu0 0
    %522 = vmatpush1.bf16.msra.mxu0 0
    %523 = vmatprep.subr.bf16.mxu0 0
    %524 = vmatpush1.bf16.msra.mxu0 0
    %525 = vmatprep.subr.bf16.mxu0 0
    %526 = vmatpush1.bf16.msra.mxu0 0
    %527 = vmatprep.subr.bf16.mxu0 0
    %528 = vmatpush1.bf16.msra.mxu0 0
    %529 = vmatprep.subr.bf16.mxu0 0
    %530 = vmatpush1.bf16.msra.mxu0 0
    %531 = vmatprep.subr.bf16.mxu0 0
    %532 = vmatpush1.bf16.msra.mxu0 0
    %533 = vmatprep.subr.bf16.mxu0 0
    %534 = vmatpush1.bf16.msra.mxu0 0
    %535 = vmatprep.mubr.bf16.mxu0 0
    %536 = vmatmul.mubr.bf16.gmra.mrb[0].mxu0 %v501
    %v537 = vpop.f32.mrb[0].mxu0
    %v538 = vadd.f32 %v474, %v537
    %v539 = vpop.f32.mrb[0].mxu0
    %v540 = vpop.f32.mrb[0].mxu0
    %v541 = vadd.f32 %v474, %v540
    %v542 = vpop.f32.mrb[0].mxu0
    %543 = vdwg.mxu0
    %544 = vst.msk [vmem:[#allocation2] sm:$0xff] %vm78, %v538
    %545 = vst.msk [vmem:[#allocation2 + $0x8] sm:$0xff] %vm78, %v541
    // Predicated region
    $region54: #{tpu_custom_call.1} parent=1 // pred_check
      _
    $region55: #{tpu_custom_call.1} parent=1 // pred_check_branch
      %547 = sbr.rel (0) target = $region57
    $region56: #{tpu_custom_call.1} parent=1 // pred_region
      %s549 = ssub.s32 256, 256
      %550 = vsyncadd [#allocation3], %s549
      %s551 = sshll.u32 [#allocation2], 4
      %s552 = int_to_ptr.vmem [resolvable:$true] %s551
      %557 = dma.vmem_to_hbm [thread:$0]  %s552, 256, %s13, [#allocation3], 128, 128, 8
    $region57: #{tpu_custom_call.1} parent=1 // pred_fallthru
      _
    // Predicated region
    $region58: #{tpu_custom_call.1} parent=1 // pred_check
      _
    $region59: #{tpu_custom_call.1} parent=1 // pred_check_branch
      %559 = sbr.rel (0) target = $region61
    $region60: #{tpu_custom_call.1} parent=1 // pred_region
      %s561 = ssub.s32 256, 256
      %562 = vsyncadd [#allocation5], %s561
      %s563 = sshll.u32 [#allocation4], 4
      %s564 = int_to_ptr.vmem [resolvable:$true] %s563
      %569 = dma.vmem_to_hbm [thread:$0]  %s564, 256, %s14, [#allocation5], 128, 128, 8
    $region61: #{tpu_custom_call.1} parent=1 // pred_fallthru
      _
    // Predicated region
    $region62: #{tpu_custom_call.1} parent=1 // pred_check
      _
    $region63: #{tpu_custom_call.1} parent=1 // pred_check_branch
      %571 = sbr.rel (0) target = $region65
    $region64: #{tpu_custom_call.1} parent=1 // pred_region
      %572 = dma.done [#allocation3], 256
    $region65: #{tpu_custom_call.1} parent=1 // pred_fallthru
      _
    // Predicated region
    $region66: #{tpu_custom_call.1} parent=1 // pred_check
      _
    $region67: #{tpu_custom_call.1} parent=1 // pred_check_branch
      %574 = sbr.rel (0) target = $region69
    $region68: #{tpu_custom_call.1} parent=1 // pred_region
      %575 = dma.done [#allocation5], 256
    $region69: #{tpu_custom_call.1} parent=1 // pred_fallthru
      _
    %576 = vsyncpa [#allocation3], 1
    %577 = vsyncpa [#allocation5], 1

</llo_original>
